<compile_context>
chip_gen: v5e
topology: v5e:2x2
jax: 0.10.0
libtpu: 0.0.40
codegen_flags: <defaults>
</compile_context>

<pallas_src>
import functools

import jax
import jax.numpy as jnp
from jax.experimental import pallas as pl
from jax.experimental.pallas import tpu as pltpu

_LANES = 128
_TARGET_BLOCK_BYTES = 2 * 1024 * 1024   # ~2 MiB per input block (f32)
_VMEM_LIMIT_BYTES = 32 * 1024 * 1024    # safe on v5e/v6e (128 MiB) and v7x (64 MiB)


def _compiler_params(n_grid_dims):
    return pltpu.CompilerParams(
        dimension_semantics=("parallel",) * n_grid_dims,
        vmem_limit_bytes=_VMEM_LIMIT_BYTES,
    )


def _round_down(x, m):
    return max(m, (x // m) * m)


# ----------------------------------------------------------------------------
# Kernels
# ----------------------------------------------------------------------------
def _ln_rows_kernel(x_ref, w_ref, b_ref, o_ref, *, eps, inv_c):
    """Generic path: x_ref (T, C), normalize along the lane (last) axis."""
    x = x_ref[...].astype(jnp.float32)
    s1 = jnp.sum(x, axis=-1, keepdims=True)           # independent reductions
    s2 = jnp.sum(x * x, axis=-1, keepdims=True)
    mean = s1 * inv_c
    var = jnp.maximum(s2 * inv_c - mean * mean, 0.0)   # biased variance, >= 0
    inv = jax.lax.rsqrt(var + eps)                     # EUP slot
    o_ref[...] = ((x - mean) * inv * w_ref[...] + b_ref[...]).astype(o_ref.dtype)


def _ln_packed_kernel(x_ref, seg_ref, w_ref, b_ref, o_ref, *, eps, inv_c):
    """Lane-packed path: x_ref (T, 128) holds P=128//C rows per lane-row.

    seg_ref is a constant (128,128) 0/1 block-diagonal matrix; x @ seg gives
    every lane the sum over its own C-wide segment (already broadcast), using
    the otherwise-idle MXU and keeping all loads/stores lane-dense.
    """
    x = x_ref[...].astype(jnp.float32)
    seg = seg_ref[...]
    s1 = jnp.dot(x, seg, preferred_element_type=jnp.float32,
                 precision=jax.lax.Precision.HIGHEST)
    s2 = jnp.dot(x * x, seg, preferred_element_type=jnp.float32,
                 precision=jax.lax.Precision.HIGHEST)
    mean = s1 * inv_c
    var = jnp.maximum(s2 * inv_c - mean * mean, 0.0)
    inv = jax.lax.rsqrt(var + eps)
    o_ref[...] = ((x - mean) * inv * w_ref[...] + b_ref[...]).astype(o_ref.dtype)


def _ln_nchw_kernel(x_ref, w_ref, b_ref, o_ref, *, eps, inv_c):
    """channels_first path: x_ref (1, C, S); reduce over the channel (sublane)
    axis, spatial stays lane-dense -> no HBM transposes needed."""
    x = x_ref[...].astype(jnp.float32)
    s1 = jnp.sum(x, axis=1, keepdims=True)
    s2 = jnp.sum(x * x, axis=1, keepdims=True)
    mean = s1 * inv_c
    var = jnp.maximum(s2 * inv_c - mean * mean, 0.0)
    inv = jax.lax.rsqrt(var + eps)
    o_ref[...] = ((x - mean) * inv * w_ref[...] + b_ref[...]).astype(o_ref.dtype)


# ----------------------------------------------------------------------------
# Wrappers
# ----------------------------------------------------------------------------
def _layer_norm_rows(x2d, w_f32, b_f32, eps):
    """LayerNorm over the last dim of a (R, C) array (channels_last)."""
    R, C = x2d.shape
    pack = (C < _LANES) and (_LANES % C == 0) and (_LANES // C) <= R and R % (_LANES // C) == 0

    if pack:
        P = _LANES // C
        L = _LANES
        Rp = R // P
        xp = x2d.reshape(Rp, L)                              # free (contiguous) reshape
        seg_id = jnp.arange(L) // C
        seg_mat = (seg_id[:, None] == seg_id[None, :]).astype(jnp.float32)
        wp = jnp.tile(w_f32, P).reshape(1, L)
        bp = jnp.tile(b_f32, P).reshape(1, L)
        tile = Rp if Rp <= 4096 else 4096                    # 4096*128*4B = 2 MiB/block
        grid = (pl.cdiv(Rp, tile),)                          # ragged edge block is masked
        out = pl.pallas_call(
            functools.partial(_ln_packed_kernel, eps=eps, inv_c=1.0 / C),
            out_shape=jax.ShapeDtypeStruct((Rp, L), x2d.dtype),
            grid=grid,
            in_specs=[
                pl.BlockSpec((tile, L), lambda i: (i, 0)),
                pl.BlockSpec((L, L), lambda i: (0, 0)),
                pl.BlockSpec((1, L), lambda i: (0, 0)),
                pl.BlockSpec((1, L), lambda i: (0, 0)),
            ],
            out_specs=pl.BlockSpec((tile, L), lambda i: (i, 0)),
            compiler_params=_compiler_params(1),
        )(xp, seg_mat, wp, bp)
        return out.reshape(R, C)

    # Fallback (C >= 128 or not packable): plain row kernel, big tiles.
    rows_per_block = _round_down(_TARGET_BLOCK_BYTES // (C * 4), 8)
    tile = R if R <= rows_per_block else rows_per_block
    grid = (pl.cdiv(R, tile),)
    out = pl.pallas_call(
        functools.partial(_ln_rows_kernel, eps=eps, inv_c=1.0 / C),
        out_shape=jax.ShapeDtypeStruct((R, C), x2d.dtype),
        grid=grid,
        in_specs=[
            pl.BlockSpec((tile, C), lambda i: (i, 0)),
            pl.BlockSpec((1, C), lambda i: (0, 0)),
            pl.BlockSpec((1, C), lambda i: (0, 0)),
        ],
        out_specs=pl.BlockSpec((tile, C), lambda i: (i, 0)),
        compiler_params=_compiler_params(1),
    )(x2d, w_f32.reshape(1, C), b_f32.reshape(1, C))
    return out


def _layer_norm_nchw(x, w_f32, b_f32, eps):
    """channels_first LayerNorm directly on NCHW (no transposes)."""
    N, C, H, W = x.shape
    HW = H * W
    x3 = x.reshape(N, C, HW)                                 # free reshape
    s_per_block = _round_down(_TARGET_BLOCK_BYTES // (C * 4), _LANES)
    tile_s = HW if HW <= s_per_block else s_per_block
    grid = (N, pl.cdiv(HW, tile_s))
    out = pl.pallas_call(
        functools.partial(_ln_nchw_kernel, eps=eps, inv_c=1.0 / C),
        out_shape=jax.ShapeDtypeStruct((N, C, HW), x.dtype),
        grid=grid,
        in_specs=[
            pl.BlockSpec((1, C, tile_s), lambda n, s: (n, 0, s)),
            pl.BlockSpec((1, C, 1), lambda n, s: (0, 0, 0)),
            pl.BlockSpec((1, C, 1), lambda n, s: (0, 0, 0)),
        ],
        out_specs=pl.BlockSpec((1, C, tile_s), lambda n, s: (n, 0, s)),
        compiler_params=_compiler_params(2),
    )(x3, w_f32.reshape(1, C, 1), b_f32.reshape(1, C, 1))
    return out.reshape(N, C, H, W)


def layer_norm(x, weight, bias, eps=1e-6, data_format="channels_last"):
    """Matches LayerNorm.forward from the PyTorch module."""
    w_f32 = weight.astype(jnp.float32)   # hoisted casts (once, not per tile)
    b_f32 = bias.astype(jnp.float32)
    if data_format == "channels_last":
        C = x.shape[-1]
        lead = x.shape[:-1]
        y = _layer_norm_rows(x.reshape(-1, C), w_f32, b_f32, eps)
        return y.reshape(*lead, C)
    elif data_format == "channels_first":
        return _layer_norm_nchw(x, w_f32, b_f32, eps)
    else:
        raise NotImplementedError


# ----------------------------------------------------------------------------
# Reference + test
# ----------------------------------------------------------------------------
def _reference(x, weight, bias, eps, data_format):
    xf = x.astype(jnp.float32)
    if data_format == "channels_last":
        mean = jnp.mean(xf, axis=-1, keepdims=True)
        var = jnp.mean((xf - mean) ** 2, axis=-1, keepdims=True)
        return ((xf - mean) / jnp.sqrt(var + eps)) * weight + bias
    else:
        mean = jnp.mean(xf, axis=1, keepdims=True)
        var = jnp.mean((xf - mean) ** 2, axis=1, keepdims=True)
        xn = (xf - mean) / jnp.sqrt(var + eps)
        return weight[None, :, None, None] * xn + bias[None, :, None, None]


if __name__ == "__main__":
    key = jax.random.PRNGKey(0)
    k1, k2, k3 = jax.random.split(key, 3)
    eps = 1e-6

    C = 32
    weight = 1.0 + 0.01 * jnp.arange(C, dtype=jnp.float32)
    bias = 0.1 * jnp.arange(C, dtype=jnp.float32)

    # channels_first (PyTorch NCHW): kernel runs directly on NCHW.
    x_cf = jax.random.normal(k1, (2, C, 8, 8), dtype=jnp.float32)
    y_cf = layer_norm(x_cf, weight, bias, eps, data_format="channels_first")
    jax.block_until_ready(y_cf)
    ref_cf = _reference(x_cf, weight, bias, eps, "channels_first")
    assert jnp.allclose(y_cf, ref_cf, atol=1e-4, rtol=1e-4)

    # channels_last (NHWC), C=32: lane-packed MXU path.
    x_cl = jax.random.normal(k2, (2, 8, 8, C), dtype=jnp.float32)
    y_cl = layer_norm(x_cl, weight, bias, eps, data_format="channels_last")
    jax.block_until_ready(y_cl)
    ref_cl = _reference(x_cl, weight, bias, eps, "channels_last")
    assert jnp.allclose(y_cl, ref_cl, atol=1e-4, rtol=1e-4)

    # channels_last with wide C (>=128): unpacked row-kernel path.
    C2 = 256
    w2 = 1.0 + 0.01 * jnp.arange(C2, dtype=jnp.float32)
    b2 = 0.1 * jnp.arange(C2, dtype=jnp.float32)
    x2 = jax.random.normal(k3, (2, 8, C2), dtype=jnp.float32)
    y2 = layer_norm(x2, w2, b2, eps, data_format="channels_last")
    jax.block_until_ready(y2)
    ref2 = _reference(x2, w2, b2, eps, "channels_last")
    assert jnp.allclose(y2, ref2, atol=1e-4, rtol=1e-4)

    print("KERNEL_OK")
</pallas_src>

<mosaic_0001>
module attributes {stable_mosaic.version = 11 : i64} {
  func.func @_ln_nchw_kernel(%arg0: i32, %arg1: i32, %arg2: memref<1x32x64xf32, #tpu.memory_space<vmem>>, %arg3: memref<1x32x1xf32, #tpu.memory_space<vmem>>, %arg4: memref<1x32x1xf32, #tpu.memory_space<vmem>>, %arg5: memref<1x32x64xf32, #tpu.memory_space<vmem>>) attributes {dimension_semantics = [#tpu.dimension_semantics<parallel>, #tpu.dimension_semantics<parallel>], iteration_bounds = array<i64: 2, 1>, scalar_prefetch = 0 : i64, scratch_operands = 0 : i64, tpu.core_type = #tpu.core_type<tc>, window_params = [{transform_indices = @transform_0, window_bounds = array<i64: 1, 32, 64>}, {pipeline_mode = #tpu.pipeline_mode<synchronous>, transform_indices = @transform_1, window_bounds = array<i64: 1, 32, 1>}, {pipeline_mode = #tpu.pipeline_mode<synchronous>, transform_indices = @transform_2, window_bounds = array<i64: 1, 32, 1>}, {transform_indices = @transform_3, window_bounds = array<i64: 1, 32, 64>}]} {
    %c0 = arith.constant 0 : index
    %c0_0 = arith.constant 0 : index
    %c0_1 = arith.constant 0 : index
    %0 = vector.load %arg2[%c0, %c0_0, %c0_1] : memref<1x32x64xf32, #tpu.memory_space<vmem>>, vector<1x32x64xf32>
    %cst = arith.constant dense<0.000000e+00> : vector<1x64xf32>
    %1 = vector.multi_reduction <add>, %0, %cst [1] : vector<1x32x64xf32> to vector<1x64xf32>
    %2 = vector.shape_cast %1 : vector<1x64xf32> to vector<1x1x64xf32>
    %3 = arith.mulf %0, %0 : vector<1x32x64xf32>
    %cst_2 = arith.constant dense<0.000000e+00> : vector<1x64xf32>
    %4 = vector.multi_reduction <add>, %3, %cst_2 [1] : vector<1x32x64xf32> to vector<1x64xf32>
    %5 = vector.shape_cast %4 : vector<1x64xf32> to vector<1x1x64xf32>
    %cst_3 = arith.constant 3.125000e-02 : f32
    %6 = vector.broadcast %cst_3 : f32 to vector<1x1x64xf32>
    %7 = arith.mulf %2, %6 : vector<1x1x64xf32>
    %cst_4 = arith.constant 3.125000e-02 : f32
    %8 = vector.broadcast %cst_4 : f32 to vector<1x1x64xf32>
    %9 = arith.mulf %5, %8 : vector<1x1x64xf32>
    %10 = arith.mulf %7, %7 : vector<1x1x64xf32>
    %11 = arith.subf %9, %10 : vector<1x1x64xf32>
    %cst_5 = arith.constant 0.000000e+00 : f32
    %12 = vector.broadcast %cst_5 : f32 to vector<1x1x64xf32>
    %13 = arith.maximumf %11, %12 : vector<1x1x64xf32>
    %cst_6 = arith.constant 9.99999997E-7 : f32
    %14 = vector.broadcast %cst_6 : f32 to vector<1x1x64xf32>
    %15 = arith.addf %13, %14 : vector<1x1x64xf32>
    %16 = math.rsqrt %15 : vector<1x1x64xf32>
    %17 = vector.broadcast %7 : vector<1x1x64xf32> to vector<1x32x64xf32>
    %18 = arith.subf %0, %17 : vector<1x32x64xf32>
    %19 = vector.broadcast %16 : vector<1x1x64xf32> to vector<1x32x64xf32>
    %20 = arith.mulf %18, %19 : vector<1x32x64xf32>
    %c0_7 = arith.constant 0 : index
    %c0_8 = arith.constant 0 : index
    %c0_9 = arith.constant 0 : index
    %21 = vector.load %arg3[%c0_7, %c0_8, %c0_9] : memref<1x32x1xf32, #tpu.memory_space<vmem>>, vector<1x32x1xf32>
    %22 = vector.broadcast %21 : vector<1x32x1xf32> to vector<1x32x64xf32>
    %23 = arith.mulf %20, %22 : vector<1x32x64xf32>
    %c0_10 = arith.constant 0 : index
    %c0_11 = arith.constant 0 : index
    %c0_12 = arith.constant 0 : index
    %24 = vector.load %arg4[%c0_10, %c0_11, %c0_12] : memref<1x32x1xf32, #tpu.memory_space<vmem>>, vector<1x32x1xf32>
    %25 = vector.broadcast %24 : vector<1x32x1xf32> to vector<1x32x64xf32>
    %26 = arith.addf %23, %25 : vector<1x32x64xf32>
    %c0_13 = arith.constant 0 : index
    %c0_14 = arith.constant 0 : index
    %c0_15 = arith.constant 0 : index
    %27 = vector.load %arg5[%c0_13, %c0_14, %c0_15] : memref<1x32x64xf32, #tpu.memory_space<vmem>>, vector<1x32x64xf32>
    tpu.vector_store %arg5[%c0_13, %c0_14, %c0_15], %26 {strides = array<i32>} : memref<1x32x64xf32, #tpu.memory_space<vmem>>, vector<1x32x64xf32>,
    return
  }
  func.func @transform_0(%arg0: i32, %arg1: i32) -> (i32, i32, i32) {
    %c0_i32 = arith.constant 0 : i32
    %c0_i32_0 = arith.constant 0 : i32
    return %arg0, %c0_i32, %arg1 : i32, i32, i32
  }
  func.func @transform_1(%arg0: i32, %arg1: i32) -> (i32, i32, i32) {
    %c0_i32 = arith.constant 0 : i32
    %c0_i32_0 = arith.constant 0 : i32
    %c0_i32_1 = arith.constant 0 : i32
    %c0_i32_2 = arith.constant 0 : i32
    return %c0_i32, %c0_i32_0, %c0_i32_1 : i32, i32, i32
  }
  func.func @transform_2(%arg0: i32, %arg1: i32) -> (i32, i32, i32) {
    %c0_i32 = arith.constant 0 : i32
    %c0_i32_0 = arith.constant 0 : i32
    %c0_i32_1 = arith.constant 0 : i32
    %c0_i32_2 = arith.constant 0 : i32
    return %c0_i32, %c0_i32_0, %c0_i32_1 : i32, i32, i32
  }
  func.func @transform_3(%arg0: i32, %arg1: i32) -> (i32, i32, i32) {
    %c0_i32 = arith.constant 0 : i32
    %c0_i32_0 = arith.constant 0 : i32
    return %arg0, %c0_i32, %arg1 : i32, i32, i32
  }
}

</mosaic_0001>

<llo_original>
// kernel: tpu_custom_call.1
$region0: #{tpu_custom_call.1}
  #allocation0 [shape = 'u32[]', space=smem, size = 0x4, offset = 0x4, fixed_abs, tag = 'smem constant byte address 0x4 - core index']
  #allocation1 [shape = 'u32[72,128]{1,0:T(1,128)}', space=vmem, size = 0x9000, scoped, tag = 'internal scratch']
  %s0 = inlined_call_operand.vmem [shape: f32[2,32,64], index: 0, kind: input, shape index: {}]
  %s1 = inlined_call_operand.vmem [shape: f32[1,32,1], index: 1, kind: input, shape index: {}]
  %s2 = inlined_call_operand.vmem [shape: f32[1,32,1], index: 2, kind: input, shape index: {}]
  %s3 = inlined_call_operand.hbm [shape: f32[2,32,64], index: 3, kind: output, shape index: {}]
  %s4 = sld [smem:[#allocation0]]
  $region45: #{tpu_custom_call.1} parent=0
    _
  %s6 = ssub.s32 1, %s4
  %s7 = scalar_select 0, %s6, %s4
  $region1: #{tpu_custom_call.1} parent=0
    #allocation2 [shape = 'u8[32768]{0}', space=vmem, size = 0x8000, scoped, tag = 'output window, operand 0']
    #allocation3 [shape = 's32[2]{0}', space=sflag, size = 0x8, scoped, tag = 'scoped memory for tpu_custom_call.1']
    %8 = vsyncpa [#allocation3], 0
    %s9 = scalar_lea.sflag [#allocation3], 1
    %10 = vsyncpa %s9, 0
    loop: start=0, step=1, limit=4
    $region2: #{tpu_custom_call.1} parent=1 // loop_pre_header
      _
    $region3: #{tpu_custom_call.1} parent=1 // loop_header
      %s12 = sphi 0, %s16
      %p13 = scmp.ge.s32.totalorder %s12, 4
      %s19 = sphi 0, %s31
      %s20 = sphi 0, %s27
      %s21 = sphi 0, %s19
      %s22 = sphi 0, %s20
      %s23 = sphi 0, %s21
      %s24 = sphi 0, %s22
      %s36 = sphi 0, %s38
      %s39 = sphi 0, %s36
      %s40 = sphi 0, %s39
      %s56 = sphi 0, %s40
      %s60 = sphi 0, %s60
      %s62 = sphi 0, %s60
      %s63 = sphi 0, %s62
      %s77 = sphi 0, %s63
      %s81 = sphi 0, %s81
      %s83 = sphi 0, %s81
      %s84 = sphi 0, %s83
      %s98 = sphi 0, %s84
      %s106 = sphi 0, %s108
      %s109 = sphi 0, %s106
      %s110 = sphi 0, %s109
      %s126 = sphi 0, %s110
    $region4: #{tpu_custom_call.1} parent=1 // loop_header_branch
      %15 = sbr.rel (%p13) target = $region8
    $region5: #{tpu_custom_call.1} parent=1 // loop_body
      %s17 = ssub.s32 %s12, 1
      %s18 = ssub.s32 %s12, 2
      %s25 = sadd.s32 1, %s20
      %p26 = scmp.ge.s32.totalorder %s25, 1
      %s27 = scalar_select %p26, 0, %s25
      %s28 = sadd.s32 1, %s19
      %s29 = scalar_select %p26, %s28, %s19
      %p30 = scmp.ge.s32.totalorder %s29, 2
      %s31 = scalar_select %p30, 0, %s29
      %s32 = ssub.s32 %s19, %s31
      %s33 = ssub.s32 %s20, %s27
      %s34 = sor.u32 %s32, %s33
      %p35 = scmp.eq.s32.totalorder %s34, 0
      %s37 = sadd.s32 %s36, 1
      %s38 = scalar_select %p35, %s36, %s37
      %p41 = pneg %p35
      %p42 = scmp.eq.s32.totalorder %s12, 1
      %p43 = por %p41, %p42
      %p44 = scmp.ne.s32.totalorder %s36, %s39
      %p45 = scmp.eq.s32.totalorder %s12, 0
      %p46 = por %p44, %p45
      %p47 = scmp.ne.s32.totalorder %s36, %s39
      %p48 = scmp.eq.s32.totalorder %s17, 1
      %p49 = por %p47, %p48
      %p50 = scmp.ne.s32.totalorder %s39, %s40
      %p51 = scmp.eq.s32.totalorder %s17, 0
      %p52 = por %p50, %p51
      %p53 = scmp.ne.s32.totalorder %s39, %s40
      %p54 = scmp.eq.s32.totalorder %s18, 1
      %p55 = por %p53, %p54
      %p57 = scmp.ne.s32.totalorder %s40, %s56
      %p58 = scmp.eq.s32.totalorder %s18, 0
      %p59 = por %p57, %p58
      %s61 = sadd.s32 %s60, 1
      %p64 = scmp.eq.s32.totalorder %s12, 1
      %p65 = scmp.ne.s32.totalorder %s60, %s62
      %p66 = scmp.eq.s32.totalorder %s12, 0
      %p67 = por %p65, %p66
      %p68 = scmp.ne.s32.totalorder %s60, %s62
      %p69 = scmp.eq.s32.totalorder %s17, 1
      %p70 = por %p68, %p69
      %p71 = scmp.ne.s32.totalorder %s62, %s63
      %p72 = scmp.eq.s32.totalorder %s17, 0
      %p73 = por %p71, %p72
      %p74 = scmp.ne.s32.totalorder %s62, %s63
      %p75 = scmp.eq.s32.totalorder %s18, 1
      %p76 = por %p74, %p75
      %p78 = scmp.ne.s32.totalorder %s63, %s77
      %p79 = scmp.eq.s32.totalorder %s18, 0
      %p80 = por %p78, %p79
      %s82 = sadd.s32 %s81, 1
      %p85 = scmp.eq.s32.totalorder %s12, 1
      %p86 = scmp.ne.s32.totalorder %s81, %s83
      %p87 = scmp.eq.s32.totalorder %s12, 0
      %p88 = por %p86, %p87
      %p89 = scmp.ne.s32.totalorder %s81, %s83
      %p90 = scmp.eq.s32.totalorder %s17, 1
      %p91 = por %p89, %p90
      %p92 = scmp.ne.s32.totalorder %s83, %s84
      %p93 = scmp.eq.s32.totalorder %s17, 0
      %p94 = por %p92, %p93
      %p95 = scmp.ne.s32.totalorder %s83, %s84
      %p96 = scmp.eq.s32.totalorder %s18, 1
      %p97 = por %p95, %p96
      %p99 = scmp.ne.s32.totalorder %s84, %s98
      %p100 = scmp.eq.s32.totalorder %s18, 0
      %p101 = por %p99, %p100
      %s102 = ssub.s32 %s19, %s31
      %s103 = ssub.s32 %s20, %s27
      %s104 = sor.u32 %s102, %s103
      %p105 = scmp.eq.s32.totalorder %s104, 0
      %s107 = sadd.s32 %s106, 1
      %s108 = scalar_select %p105, %s106, %s107
      %p111 = pneg %p105
      %p112 = scmp.eq.s32.totalorder %s12, 1
      %p113 = por %p111, %p112
      %p114 = scmp.ne.s32.totalorder %s106, %s109
      %p115 = scmp.eq.s32.totalorder %s12, 0
      %p116 = por %p114, %p115
      %p117 = scmp.ne.s32.totalorder %s106, %s109
      %p118 = scmp.eq.s32.totalorder %s17, 1
      %p119 = por %p117, %p118
      %p120 = scmp.ne.s32.totalorder %s109, %s110
      %p121 = scmp.eq.s32.totalorder %s17, 0
      %p122 = por %p120, %p121
      %p123 = scmp.ne.s32.totalorder %s109, %s110
      %p124 = scmp.eq.s32.totalorder %s18, 1
      %p125 = por %p123, %p124
      %p127 = scmp.ne.s32.totalorder %s110, %s126
      %p128 = scmp.eq.s32.totalorder %s18, 0
      %p129 = por %p127, %p128
      %p130 = scmp.le.s32.totalorder 1, %s12
      %p131 = scmp.lt.s32.totalorder %s12, 3
      %p132 = pnand %p130, %p131
      %p133 = pneg %p132
      // Predicated region
      $region9: #{tpu_custom_call.1} parent=5 // pred_check
        _
      $region10: #{tpu_custom_call.1} parent=5 // pred_check_branch
        %135 = sbr.rel (%p132) target = $region12
      $region11: #{tpu_custom_call.1} parent=5 // pred_region
        %s136 = ssub.s32 %s12, 1
        // Predicated region
        $region13: #{tpu_custom_call.1} parent=11 // pred_check
          %p137 = pneg %p73
        $region14: #{tpu_custom_call.1} parent=11 // pred_check_branch
          %139 = sbr.rel (%p137) target = $region16
        $region15: #{tpu_custom_call.1} parent=11 // pred_region
          _
        $region16: #{tpu_custom_call.1} parent=11 // pred_fallthru
          _
        // Predicated region
        $region17: #{tpu_custom_call.1} parent=11 // pred_check
          %p140 = pneg %p94
        $region18: #{tpu_custom_call.1} parent=11 // pred_check_branch
          %142 = sbr.rel (%p140) target = $region20
        $region19: #{tpu_custom_call.1} parent=11 // pred_region
          _
        $region20: #{tpu_custom_call.1} parent=11 // pred_fallthru
          _
      $region12: #{tpu_custom_call.1} parent=5 // pred_fallthru
        _
      %p143 = scmp.lt.s32.totalorder %s12, 2
      // Predicated region
      $region21: #{tpu_custom_call.1} parent=5 // pred_check
        %p144 = pneg %p143
      $region22: #{tpu_custom_call.1} parent=5 // pred_check_branch
        %146 = sbr.rel (%p144) target = $region24
      $region23: #{tpu_custom_call.1} parent=5 // pred_region
        // Predicated region
        $region25: #{tpu_custom_call.1} parent=23 // pred_check
          %p147 = pneg %p46
        $region26: #{tpu_custom_call.1} parent=23 // pred_check_branch
          %149 = sbr.rel (%p147) target = $region28
        $region27: #{tpu_custom_call.1} parent=23 // pred_region
          %p150 = scmp.lt.s32.totalorder %s19, 1
          %s151 = scalar_select %p150, %s19, 1
          %p152 = scmp.lt.s32.totalorder %s20, 0
          %s153 = scalar_select %p152, %s20, 0
          %s154 = smul.addr %s151, 4
          %s155 = sadd.s32 %s153, %s154
          %s156 = smul.addr %s155, 8
          %s157 = scalar_lea.vmem %s0, %s156
        $region28: #{tpu_custom_call.1} parent=23 // pred_fallthru
          _
      $region24: #{tpu_custom_call.1} parent=5 // pred_fallthru
        _
      %p158 = scmp.le.s32.totalorder 1, %s12
      %p159 = scmp.lt.s32.totalorder %s12, 3
      %p160 = pnand %p158, %p159
      %p161 = pneg %p160
      // Predicated region
      $region29: #{tpu_custom_call.1} parent=5 // pred_check
        _
      $region30: #{tpu_custom_call.1} parent=5 // pred_check_branch
        %163 = sbr.rel (%p160) target = $region32
      $region31: #{tpu_custom_call.1} parent=5 // pred_region
        %s164 = ssub.s32 %s12, 1
        %p165 = scmp.lt.s32.totalorder %s21, 1
        %s166 = scalar_select %p165, %s21, 1
        %p167 = scmp.lt.s32.totalorder %s22, 0
        %s168 = scalar_select %p167, %s22, 0
        %s169 = smul.addr %s166, 4
        %s170 = sadd.s32 %s168, %s169
        %s171 = smul.addr %s170, 8
        %s172 = scalar_lea.vmem %s0, %s171
        %p173 = pneg %p52
        %p174 = pneg %p49
        %p175 = pneg %p73
        %p176 = pneg %p70
        %p177 = pneg %p94
        %p178 = pneg %p91
        %p179 = pneg %p122
        %p180 = pneg %p119
        %s181 = sand.u32 %s109, 1
        %s182 = scalar_lea.sflag [#allocation3], %s181
        %s183 = sand.u32 %s109, 1
        %s184 = smul.addr %s183, 32
        %s185 = scalar_lea.vmem [#allocation2], %s184
        %p186 = scmp.lt.s32.totalorder %s21, 1
        %s187 = scalar_select %p186, %s21, 1
        %p188 = scmp.lt.s32.totalorder %s22, 0
        %s189 = scalar_select %p188, %s22, 0
        %s190 = smul.addr %s187, 4
        %s191 = sadd.s32 %s189, %s190
        %s192 = smul.addr %s191, 8
        %s193 = scalar_lea.vmem %s0, %s192
        %v194 = vld [vmem:[%s193] sm:$0xff]
        %v195 = vld [vmem:[%s193 + $0x8] sm:$0xff]
        %v196 = vld [vmem:[%s193 + $0x10] sm:$0xff]
        %v197 = vld [vmem:[%s193 + $0x18] sm:$0xff]
        %vm198 = vcmask 523264
        %v199 = vsel %vm198, %v194, 0.0
        %v200 = vsel %vm198, %v195, 0.0
        %v201 = vadd.f32 %v199, %v200
        %v202 = vsel %vm198, %v196, 0.0
        %v203 = vadd.f32 %v201, %v202
        %v204 = vsel %vm198, %v197, 0.0
        %v205 = vadd.f32 %v203, %v204
        %v206 = vrot.slane %v205, 4
        %v207 = vadd.f32 %v205, %v206
        %v208 = vrot.slane %v207, 2
        %v209 = vadd.f32 %v207, %v208
        %v210 = vrot.slane %v209, 1
        %v211 = vadd.f32 %v209, %v210
        %v212 = vmul.f32 %v194, %v194
        %v213 = vmul.f32 %v195, %v195
        %v214 = vmul.f32 %v196, %v196
        %v215 = vmul.f32 %v197, %v197
        %v216 = vsel %vm198, %v212, 0.0
        %v217 = vsel %vm198, %v213, 0.0
        %v218 = vadd.f32 %v216, %v217
        %v219 = vsel %vm198, %v214, 0.0
        %v220 = vadd.f32 %v218, %v219
        %v221 = vsel %vm198, %v215, 0.0
        %v222 = vadd.f32 %v220, %v221
        %v223 = vrot.slane %v222, 4
        %v224 = vadd.f32 %v222, %v223
        %v225 = vrot.slane %v224, 2
        %v226 = vadd.f32 %v224, %v225
        %v227 = vrot.slane %v226, 1
        %v228 = vadd.f32 %v226, %v227
        %v229 = vmul.f32 %v211, 0.03125
        %v230 = vmul.f32 %v228, 0.03125
        %v231 = vmul.f32 %v229, %v229
        %v232 = vsub.f32 %v230, %v231
        %v233 = vmax.f32 %v232, 0.0
        %v234 = vadd.f32 %v233, 1e-06
        %v235 = vrsqrt.pop %v234
        %v236 = vmul.f32 %v235, %v234
        %v237 = vmul.f32 %v236, %v235
        %v238 = vmul.f32 0.5, %v237
        %v239 = vsub.f32 1.5, %v238
        %v240 = vmul.f32 %v235, %v239
        %vm241 = vweird.f32 %v234
        %vm242 = vweird.f32 %v235
        %vm243 = vmor %vm241, %vm242
        %v244 = vsel %vm243, %v235, %v240
        %v245 = vsub.f32 %v194, %v229
        %v246 = vsub.f32 %v195, %v229
        %v247 = vsub.f32 %v196, %v229
        %v248 = vsub.f32 %v197, %v229
        %v249 = vmul.f32 %v245, %v244
        %v250 = vmul.f32 %v246, %v244
        %v251 = vmul.f32 %v247, %v244
        %v252 = vmul.f32 %v248, %v244
        %v253 = vld [vmem:[%s1] sm:$0xff]
        %v254 = vld [vmem:[%s1 + $0x8] sm:$0xff]
        %v255 = vld [vmem:[%s1 + $0x10] sm:$0xff]
        %v256 = vld [vmem:[%s1 + $0x18] sm:$0xff]
        %258 = vset.pattern.permute.xlu0 0
        %259 = vperm.xlu0 %258, %v253
        %v260 = vpop.permute.xlu0 %259
        %263 = vset.pattern.permute.xlu0 0
        %264 = vperm.xlu0 %263, %v254
        %v265 = vpop.permute.xlu0 %264
        %268 = vset.pattern.permute.xlu0 0
        %269 = vperm.xlu0 %268, %v255
        %v270 = vpop.permute.xlu0 %269
        %273 = vset.pattern.permute.xlu0 0
        %274 = vperm.xlu0 %273, %v256
        %v275 = vpop.permute.xlu0 %274
        %v277 = vmul.f32 %v249, %v260
        %v278 = vmul.f32 %v250, %v265
        %v279 = vmul.f32 %v251, %v270
        %v280 = vmul.f32 %v252, %v275
        %v281 = vld [vmem:[%s2] sm:$0xff]
        %v282 = vld [vmem:[%s2 + $0x8] sm:$0xff]
        %v283 = vld [vmem:[%s2 + $0x10] sm:$0xff]
        %v284 = vld [vmem:[%s2 + $0x18] sm:$0xff]
        %286 = vset.pattern.permute.xlu0 0
        %287 = vperm.xlu0 %286, %v281
        %v288 = vpop.permute.xlu0 %287
        %291 = vset.pattern.permute.xlu0 0
        %292 = vperm.xlu0 %291, %v282
        %v293 = vpop.permute.xlu0 %292
        %296 = vset.pattern.permute.xlu0 0
        %297 = vperm.xlu0 %296, %v283
        %v298 = vpop.permute.xlu0 %297
        %301 = vset.pattern.permute.xlu0 0
        %302 = vperm.xlu0 %301, %v284
        %v303 = vpop.permute.xlu0 %302
        %v305 = vadd.f32 %v277, %v288
        %v306 = vadd.f32 %v278, %v293
        %v307 = vadd.f32 %v279, %v298
        %v308 = vadd.f32 %v280, %v303
        %309 = vst.msk [vmem:[%s185] sm:$0xff] %vm198, %v305
        %310 = vst.msk [vmem:[%s185 + $0x8] sm:$0xff] %vm198, %v306
        %311 = vst.msk [vmem:[%s185 + $0x10] sm:$0xff] %vm198, %v307
        %312 = vst.msk [vmem:[%s185 + $0x18] sm:$0xff] %vm198, %v308
        %s313 = sand.u32 %s109, 1
        %s314 = scalar_lea.sflag [#allocation3], %s313
        %s315 = sand.u32 %s109, 1
        %s316 = smul.addr %s315, 32
        %s317 = scalar_lea.vmem [#allocation2], %s316
        // Predicated region
        $region33: #{tpu_custom_call.1} parent=31 // pred_check
          %p318 = pneg %p119
        $region34: #{tpu_custom_call.1} parent=31 // pred_check_branch
          %320 = sbr.rel (%p318) target = $region36
        $region35: #{tpu_custom_call.1} parent=31 // pred_region
          %322 = vsyncadd %s314, 0
          %s323 = smul.addr %s21, 4
          %s324 = sadd.s32 %s22, %s323
          %s325 = smul.addr %s324, 8
          %s326 = scalar_lea.hbm %s3, %s325
          %s327 = sshll.u32 %s317, 4
          %s328 = int_to_ptr.vmem [resolvable:$true] %s327
          %s329 = sshll.u32 %s326, 4
          %s330 = int_to_ptr.hbm [resolvable:$true] %s329
          %335 = dma.vmem_to_hbm [thread:$0]  %s328, 512, %s330, %s314, 128, 128, 8
        $region36: #{tpu_custom_call.1} parent=31 // pred_fallthru
          _
      $region32: #{tpu_custom_call.1} parent=5 // pred_fallthru
        _
      %p336 = scmp.le.s32.totalorder 2, %s12
      // Predicated region
      $region37: #{tpu_custom_call.1} parent=5 // pred_check
        %p337 = pneg %p336
      $region38: #{tpu_custom_call.1} parent=5 // pred_check_branch
        %339 = sbr.rel (%p337) target = $region40
      $region39: #{tpu_custom_call.1} parent=5 // pred_region
        %s340 = ssub.s32 %s12, 2
        // Predicated region
        $region41: #{tpu_custom_call.1} parent=39 // pred_check
          %p341 = pneg %p125
        $region42: #{tpu_custom_call.1} parent=39 // pred_check_branch
          %343 = sbr.rel (%p341) target = $region44
        $region43: #{tpu_custom_call.1} parent=39 // pred_region
          %s344 = sand.u32 %s110, 1
          %s345 = scalar_lea.sflag [#allocation3], %s344
          %s346 = sand.u32 %s110, 1
          %s347 = smul.addr %s346, 32
          %s348 = scalar_lea.vmem [#allocation2], %s347
          %350 = dma.done %s345, 512
        $region44: #{tpu_custom_call.1} parent=39 // pred_fallthru
          _
      $region40: #{tpu_custom_call.1} parent=5 // pred_fallthru
        _
    $region6: #{tpu_custom_call.1} parent=1 // loop_footer
      %s16 = sadd.s32 1, %s12
    $region7: #{tpu_custom_call.1} parent=1 // loop_footer_branch
      %11 = sbr.rel target = $region3
    $region8: #{tpu_custom_call.1} parent=1 // loop_exit
      _
    %351 = vsyncpa [#allocation3], 1
    %s352 = scalar_lea.sflag [#allocation3], 1
    %353 = vsyncpa %s352, 1

</llo_original>
